<compile_context>
chip_gen: v6e
topology: v6e:2x2x1
jax: 0.10.0
libtpu: 0.0.40
codegen_flags: <defaults>
</compile_context>

<pallas_src>
import jax
import jax.numpy as jnp
from jax.experimental import pallas as pl
from jax.experimental.pallas import tpu as pltpu

EPSILON = 1e-40
# 1e-40 is a float32 subnormal; the TPU VPU flushes denormals to zero, which
# would turn clamp(x, 1e-40, 1.0) into 0 and log(0) = -inf for x <= 0.
# Use the smallest normal f32 as the effective clamp floor instead.
CLAMP_LO = max(EPSILON, float(jnp.finfo(jnp.float32).tiny))

LANE = 128      # lane width unit
C_MAX = 512     # lane-dense last dim (multiple of 128)
TM_MAX = 512    # row-tile height (multiple of 8)


def _round_up(x, m):
    return ((x + m - 1) // m) * m


def _dloss_kernel(real_ref, gen_ref, out_ref):
    real = real_ref[...].astype(jnp.float32)
    gen = gen_ref[...].astype(jnp.float32)

    # log terms only; the negation is hoisted to the wrapper finalize.
    t = (jnp.log(jnp.clip(real, CLAMP_LO, 1.0))
         + jnp.log(jnp.clip(1.0 - gen, CLAMP_LO, 1.0)))

    tm, c = t.shape
    # Fold lane groups with static, tile-aligned slices (pure VPU adds).
    part = t[:, 0:LANE]
    for j in range(1, c // LANE):
        part = part + t[:, j * LANE:(j + 1) * LANE]
    # Fold sublane-tile rows (vreg-wise adds) down to one (8, 128) vreg.
    part = jnp.sum(part.reshape(tm // 8, 8, LANE), axis=0)
    out_ref[...] = part


def dloss(logits_real, logits_gen):
    """Pallas implementation of DLoss.forward. Returns a float32 scalar."""
    assert logits_real.shape == logits_gen.shape

    total = 1
    for d in logits_real.shape:
        total *= d

    # Lane-dense 2D slab geometry.
    c = C_MAX if total >= C_MAX else LANE
    rows_needed = pl.cdiv(total, c)
    tm = min(TM_MAX, _round_up(rows_needed, 8))
    rows = _round_up(rows_needed, tm)
    num_blocks = rows // tm
    padded_total = rows * c

    real_flat = logits_real.reshape(-1)
    gen_flat = logits_gen.reshape(-1)
    pad = padded_total - total
    if pad:
        # real padded with 1.0, gen with 0.0 -> both contribute zero loss.
        real_flat = jnp.concatenate(
            [real_flat, jnp.ones((pad,), dtype=real_flat.dtype)])
        gen_flat = jnp.concatenate(
            [gen_flat, jnp.zeros((pad,), dtype=gen_flat.dtype)])
    real2d = real_flat.reshape(rows, c)
    gen2d = gen_flat.reshape(rows, c)

    partials = pl.pallas_call(
        _dloss_kernel,
        out_shape=jax.ShapeDtypeStruct((num_blocks * 8, LANE), jnp.float32),
        grid=(num_blocks,),
        in_specs=[
            pl.BlockSpec((tm, c), lambda i: (i, 0)),
            pl.BlockSpec((tm, c), lambda i: (i, 0)),
        ],
        out_specs=pl.BlockSpec((8, LANE), lambda i: (i, 0)),
        compiler_params=pltpu.CompilerParams(
            dimension_semantics=("parallel",),
            vmem_limit_bytes=32 * 1024 * 1024,
        ),
    )(real2d, gen2d)

    # Finalize: single cross-lane reduce, one negate, static 1/n multiply
    # over the TRUE (unpadded) element count.
    return -jnp.sum(partials) * (1.0 / total)


def _reference(logits_real, logits_gen):
    real_c = jnp.clip(logits_real.astype(jnp.float32), CLAMP_LO, 1.0)
    gen_c = jnp.clip(1.0 - logits_gen.astype(jnp.float32), CLAMP_LO, 1.0)
    return jnp.mean(-jnp.log(real_c) - jnp.log(gen_c))


if __name__ == "__main__":
    key = jax.random.PRNGKey(0)
    k_real, k_gen = jax.random.split(key)

    # Discriminator sigmoid outputs: batch=2, seq=8, feat=16 (values in [0,1]).
    shape = (2, 8, 16)
    logits_real = jax.random.uniform(k_real, shape, dtype=jnp.float32)
    logits_gen = jax.random.uniform(k_gen, shape, dtype=jnp.float32)

    loss = jax.block_until_ready(dloss(logits_real, logits_gen))
    ref = jax.block_until_ready(_reference(logits_real, logits_gen))
    assert jnp.allclose(loss, ref, rtol=1e-5, atol=1e-5), (loss, ref)

    # Second check: an odd-sized input that exercises padding and the
    # multi-block (grid > 1) path.
    shape2 = (2, 257, 513)
    k_real2, k_gen2 = jax.random.split(jax.random.PRNGKey(1))
    r2 = jax.random.uniform(k_real2, shape2, dtype=jnp.float32)
    g2 = jax.random.uniform(k_gen2, shape2, dtype=jnp.float32)
    loss2 = jax.block_until_ready(dloss(r2, g2))
    ref2 = jax.block_until_ready(_reference(r2, g2))
    assert jnp.allclose(loss2, ref2, rtol=1e-5, atol=1e-5), (loss2, ref2)

    print("KERNEL_OK")
</pallas_src>

<mosaic_0001>
module attributes {stable_mosaic.version = 11 : i64} {
  func.func @_dloss_kernel(%arg0: i32, %arg1: memref<8x128xf32, #tpu.memory_space<vmem>>, %arg2: memref<8x128xf32, #tpu.memory_space<vmem>>, %arg3: memref<8x128xf32, #tpu.memory_space<vmem>>) attributes {dimension_semantics = [#tpu.dimension_semantics<parallel>], iteration_bounds = array<i64: 1>, scalar_prefetch = 0 : i64, scratch_operands = 0 : i64, tpu.core_type = #tpu.core_type<tc>, window_params = [{transform_indices = @transform_0, window_bounds = array<i64: 8, 128>}, {transform_indices = @transform_1, window_bounds = array<i64: 8, 128>}, {transform_indices = @transform_2, window_bounds = array<i64: 8, 128>}]} {
    %c0 = arith.constant 0 : index
    %c0_0 = arith.constant 0 : index
    %0 = vector.load %arg1[%c0, %c0_0] : memref<8x128xf32, #tpu.memory_space<vmem>>, vector<8x128xf32>
    %c0_1 = arith.constant 0 : index
    %c0_2 = arith.constant 0 : index
    %1 = vector.load %arg2[%c0_1, %c0_2] : memref<8x128xf32, #tpu.memory_space<vmem>>, vector<8x128xf32>
    %cst = arith.constant 1.17549435E-38 : f32
    %cst_3 = arith.constant 1.000000e+00 : f32
    %2 = vector.broadcast %cst : f32 to vector<8x128xf32>
    %3 = arith.maximumf %2, %0 : vector<8x128xf32>
    %4 = vector.broadcast %cst_3 : f32 to vector<8x128xf32>
    %5 = arith.minimumf %4, %3 : vector<8x128xf32>
    %6 = math.log %5 : vector<8x128xf32>
    %cst_4 = arith.constant 1.000000e+00 : f32
    %7 = vector.broadcast %cst_4 : f32 to vector<8x128xf32>
    %8 = arith.subf %7, %1 : vector<8x128xf32>
    %cst_5 = arith.constant 1.17549435E-38 : f32
    %cst_6 = arith.constant 1.000000e+00 : f32
    %9 = vector.broadcast %cst_5 : f32 to vector<8x128xf32>
    %10 = arith.maximumf %9, %8 : vector<8x128xf32>
    %11 = vector.broadcast %cst_6 : f32 to vector<8x128xf32>
    %12 = arith.minimumf %11, %10 : vector<8x128xf32>
    %13 = math.log %12 : vector<8x128xf32>
    %14 = arith.addf %6, %13 : vector<8x128xf32>
    %15 = vector.shape_cast %14 : vector<8x128xf32> to vector<1x8x128xf32>
    %cst_7 = arith.constant dense<0.000000e+00> : vector<8x128xf32>
    %16 = vector.multi_reduction <add>, %15, %cst_7 [0] : vector<1x8x128xf32> to vector<8x128xf32>
    %c0_8 = arith.constant 0 : index
    %c0_9 = arith.constant 0 : index
    %17 = vector.load %arg3[%c0_8, %c0_9] : memref<8x128xf32, #tpu.memory_space<vmem>>, vector<8x128xf32>
    tpu.vector_store %arg3[%c0_8, %c0_9], %16 {strides = array<i32>} : memref<8x128xf32, #tpu.memory_space<vmem>>, vector<8x128xf32>,
    return
  }
  func.func @transform_0(%arg0: i32) -> (i32, i32) {
    %c0_i32 = arith.constant 0 : i32
    %c0_i32_0 = arith.constant 0 : i32
    return %arg0, %c0_i32 : i32, i32
  }
  func.func @transform_1(%arg0: i32) -> (i32, i32) {
    %c0_i32 = arith.constant 0 : i32
    %c0_i32_0 = arith.constant 0 : i32
    return %arg0, %c0_i32 : i32, i32
  }
  func.func @transform_2(%arg0: i32) -> (i32, i32) {
    %c0_i32 = arith.constant 0 : i32
    %c0_i32_0 = arith.constant 0 : i32
    return %arg0, %c0_i32 : i32, i32
  }
}

</mosaic_0001>

<llo_original>
// kernel: tpu_custom_call.1
$region0: #{tpu_custom_call.1}
  #allocation0 [shape = 'u32[]', space=smem, size = 0x4, offset = 0x4, fixed_abs, tag = 'smem constant byte address 0x4 - core index']
  #allocation1 [shape = 'u32[144,128]{1,0:T(1,128)}', space=vmem, size = 0x12000, scoped, tag = 'internal scratch']
  %s0 = inlined_call_operand.hbm [shape: f32[8,128], index: 0, kind: input, shape index: {}]
  %s1 = inlined_call_operand.hbm [shape: f32[8,128], index: 1, kind: input, shape index: {}]
  %s2 = inlined_call_operand.hbm [shape: f32[8,128], index: 2, kind: output, shape index: {}]
  %s3 = sld [smem:[#allocation0]]
  $region26: #{tpu_custom_call.1} parent=0
    _
  %s5 = ssub.s32 1, %s3
  %s6 = scalar_select 0, %s5, %s3
  $region1: #{tpu_custom_call.1} parent=0
    #allocation2 [shape = 'u8[4096]{0}', space=vmem, size = 0x1000, scoped, tag = 'input window, operand 0, single buffered']
    #allocation3 [shape = 's32[1]{0}', space=sflag, size = 0x4, scoped, tag = 'scoped memory for tpu_custom_call.1']
    #allocation4 [shape = 's32[1]{0}', space=sflag, size = 0x4, scoped, tag = 'scoped memory for tpu_custom_call.1']
    #allocation5 [shape = 'u8[4096]{0}', space=vmem, size = 0x1000, scoped, tag = 'input window, operand 1, single buffered']
    #allocation6 [shape = 's32[1]{0}', space=sflag, size = 0x4, scoped, tag = 'scoped memory for tpu_custom_call.1']
    #allocation7 [shape = 'u8[4096]{0}', space=vmem, size = 0x1000, scoped, tag = 'output window, operand 0, single buffered']
    %7 = vsyncpa [#allocation3], 0
    %8 = vsyncpa [#allocation6], 0
    %9 = vsyncpa [#allocation4], 0
    // Predicated region
    $region2: #{tpu_custom_call.1} parent=1 // pred_check
      _
    $region3: #{tpu_custom_call.1} parent=1 // pred_check_branch
      %11 = sbr.rel (0) target = $region5
    $region4: #{tpu_custom_call.1} parent=1 // pred_region
      %s13 = ssub.s32 128, 128
      %14 = vsyncadd [#allocation3], %s13
      %s16 = sshll.u32 [#allocation2], 4
      %s17 = int_to_ptr.vmem [resolvable:$true] %s16
      %19 = dma.hbm_to_vmem [thread:$0]  %s0, 128, %s17, [#allocation3]
    $region5: #{tpu_custom_call.1} parent=1 // pred_fallthru
      _
    // Predicated region
    $region6: #{tpu_custom_call.1} parent=1 // pred_check
      _
    $region7: #{tpu_custom_call.1} parent=1 // pred_check_branch
      %21 = sbr.rel (0) target = $region9
    $region8: #{tpu_custom_call.1} parent=1 // pred_region
      %s23 = ssub.s32 128, 128
      %24 = vsyncadd [#allocation6], %s23
      %s26 = sshll.u32 [#allocation5], 4
      %s27 = int_to_ptr.vmem [resolvable:$true] %s26
      %29 = dma.hbm_to_vmem [thread:$0]  %s1, 128, %s27, [#allocation6]
    $region9: #{tpu_custom_call.1} parent=1 // pred_fallthru
      _
    // Predicated region
    $region10: #{tpu_custom_call.1} parent=1 // pred_check
      _
    $region11: #{tpu_custom_call.1} parent=1 // pred_check_branch
      %31 = sbr.rel (0) target = $region13
    $region12: #{tpu_custom_call.1} parent=1 // pred_region
      %32 = dma.done [#allocation3], 128
    $region13: #{tpu_custom_call.1} parent=1 // pred_fallthru
      _
    // Predicated region
    $region14: #{tpu_custom_call.1} parent=1 // pred_check
      _
    $region15: #{tpu_custom_call.1} parent=1 // pred_check_branch
      %34 = sbr.rel (0) target = $region17
    $region16: #{tpu_custom_call.1} parent=1 // pred_region
      %35 = dma.done [#allocation6], 128
    $region17: #{tpu_custom_call.1} parent=1 // pred_fallthru
      _
    %v36 = vld [vmem:[#allocation2] sm:$0xff]
    %v37 = vld [vmem:[#allocation5] sm:$0xff]
    %v38 = vmax.f32 %v36, 1.1754944e-38
    %v39 = vmin.f32 %v38, 1.0
    %v40 = vlog2.pop %v39
    %v41 = vmul.f32 %v40, 0.6931472
    %v42 = vsub.f32 1.0, %v37
    %v43 = vmax.f32 %v42, 1.1754944e-38
    %v44 = vmin.f32 %v43, 1.0
    %v45 = vlog2.pop %v44
    %v46 = vmul.f32 %v45, 0.6931472
    %v47 = vadd.f32 %v41, %v46
    %v48 = vadd.f32 %v47, 0.0
    %49 = vst [vmem:[#allocation7] sm:$0xff] %v48
    // Predicated region
    $region18: #{tpu_custom_call.1} parent=1 // pred_check
      _
    $region19: #{tpu_custom_call.1} parent=1 // pred_check_branch
      %51 = sbr.rel (0) target = $region21
    $region20: #{tpu_custom_call.1} parent=1 // pred_region
      %s53 = ssub.s32 128, 128
      %54 = vsyncadd [#allocation4], %s53
      %s56 = sshll.u32 [#allocation7], 4
      %s57 = int_to_ptr.vmem [resolvable:$true] %s56
      %59 = dma.vmem_to_hbm [thread:$0]  %s57, 128, %s2, [#allocation4]
    $region21: #{tpu_custom_call.1} parent=1 // pred_fallthru
      _
    // Predicated region
    $region22: #{tpu_custom_call.1} parent=1 // pred_check
      _
    $region23: #{tpu_custom_call.1} parent=1 // pred_check_branch
      %61 = sbr.rel (0) target = $region25
    $region24: #{tpu_custom_call.1} parent=1 // pred_region
      %62 = dma.done [#allocation4], 128
    $region25: #{tpu_custom_call.1} parent=1 // pred_fallthru
      _
    %63 = vsyncpa [#allocation3], 1
    %64 = vsyncpa [#allocation6], 1
    %65 = vsyncpa [#allocation4], 1

</llo_original>
